<compile_context>
chip_gen: v6e
topology: v6e:2x2x1
jax: 0.10.0
libtpu: 0.0.40
codegen_flags: <defaults>
</compile_context>

<pallas_src>
import jax
import jax.numpy as jnp
import numpy as np
from jax.experimental import pallas as pl
from jax.experimental.pallas import tpu as pltpu


EMB_DIM = 20  # fixed by the module: nn.Embedding(input_size, 20)


# ---------------------------------------------------------------------------
# Kernel
# ---------------------------------------------------------------------------
def _lstm_kernel(idx_ref, tbl_ref, h0_ref, c0_ref, whh_ref, wout_ref, bout_ref,
                 out_ref, hn_ref, cn_ref):
    """Single-shot kernel: fused-embedding LSTM recurrence + linear head.

    idx_ref : (T,)   int32 in SMEM      token ids
    tbl_ref : (V,4H) f32  in VMEM       emb @ W_ih^T + b, gate order (i,f,o,g),
                                        i/f/o columns pre-scaled by 0.5
    whh_ref : (H,4H) f32  in VMEM       W_hh^T, same reorder + 0.5 pre-scale
    """
    T = idx_ref.shape[0]
    H = h0_ref.shape[-1]

    w_hh = whh_ref[...]                                   # (H, 4H)
    h = h0_ref[...]                                       # (1, H)
    c = c0_ref[...]                                       # (1, H)

    # Fully unrolled recurrence; the per-step table-row load does not depend
    # on h/c, so the scheduler can hoist/overlap it with the matmul chain.
    # TODO(synk): for long sequences use lax.fori_loop(unroll=4..8) + a VMEM
    #             xw scratch instead of full unroll.
    for t in range(T):
        xw_t = tbl_ref[pl.ds(idx_ref[t], 1), :]           # (1, 4H) dynamic row
        gates = (jnp.dot(h, w_hh, preferred_element_type=jnp.float32)
                 + xw_t)                                  # (1, 4H)
        # One tanh over the whole 4H slab.  Because the i/f/o columns of the
        # weights/bias were pre-scaled by 0.5, tanh gives tanh(z/2) there and
        # sigmoid(z) = 0.5*(tanh(z/2)+1).  g columns are unscaled -> tanh(z).
        tg = jnp.tanh(gates)
        i_g = 0.5 * (tg[:, 0 * H:1 * H] + 1.0)
        f_g = 0.5 * (tg[:, 1 * H:2 * H] + 1.0)
        o_g = 0.5 * (tg[:, 2 * H:3 * H] + 1.0)
        g_g = tg[:, 3 * H:]
        c = f_g * c + i_g * g_g
        h = o_g * jnp.tanh(c)

    # Linear head on the last timestep + numerically-stable log-softmax.
    logits = (jnp.dot(h, wout_ref[...], preferred_element_type=jnp.float32)
              + bout_ref[...])                            # (1, O)
    m = jnp.max(logits, axis=-1, keepdims=True)
    lse = jnp.log(jnp.sum(jnp.exp(logits - m), axis=-1, keepdims=True)) + m
    out_ref[...] = logits - lse
    hn_ref[...] = h.astype(hn_ref.dtype)
    cn_ref[...] = c.astype(cn_ref.dtype)


# ---------------------------------------------------------------------------
# One-time parameter preparation (NOT on the per-call path)
# ---------------------------------------------------------------------------
def prepare_params(params):
    """Fold embedding, W_ih, bias, gate reorder and 0.5 pre-scale into
    kernel-ready tensors.  Call once (e.g. at init / checkpoint load)."""
    H = params["w_hh_t"].shape[0]

    def _reorder(w):  # (i, f, g, o) -> (i, f, o, g)
        i, f, g, o = jnp.split(w, 4, axis=-1)
        return jnp.concatenate([i, f, o, g], axis=-1)

    w_ih_r = _reorder(params["w_ih_t"])                   # (E, 4H)
    w_hh_r = _reorder(params["w_hh_t"])                   # (H, 4H)
    b_r = _reorder(params["b_gates"])                     # (1, 4H)

    # Fuse embedding with input projection + bias (associativity => exact).
    table_proj = params["embedding"].astype(jnp.float32) @ w_ih_r + b_r  # (V,4H)

    # Pre-scale i/f/o columns (first 3H after reorder) by 0.5 for the
    # single-tanh sigmoid trick.  g columns stay untouched.
    scale = jnp.concatenate([jnp.full((1, 3 * H), 0.5, jnp.float32),
                             jnp.ones((1, H), jnp.float32)], axis=-1)
    return {
        "table_proj": (table_proj * scale).astype(jnp.float32),
        "w_hh": (w_hh_r * scale).astype(jnp.float32),
        "w_out": params["w_out_t"].astype(jnp.float32),
        "b_out": params["b_out"].astype(jnp.float32),
    }


# ---------------------------------------------------------------------------
# Forward wrapper (mirrors LSTM.forward(input, hidden))
# ---------------------------------------------------------------------------
@jax.jit
def lstm_forward(indices, hidden, kparams):
    """indices: (T, 1) int32 token ids; hidden: (h0, c0), each (1, 1, H).
    Returns (log_probs (1, O), (h_n (1,1,H), c_n (1,1,H)))."""
    h0, c0 = hidden
    table = kparams["table_proj"]                         # (V, 4H)
    w_hh = kparams["w_hh"]                                # (H, 4H)
    w_out = kparams["w_out"]                              # (H, O)
    b_out = kparams["b_out"]                              # (1, O)

    T = indices.shape[0]
    H = w_hh.shape[0]
    O = w_out.shape[1]

    ids = indices.reshape(T).astype(jnp.int32)            # 1-D for cheap SMEM
    h0_2d = h0.reshape(1, H).astype(jnp.float32)
    c0_2d = c0.reshape(1, H).astype(jnp.float32)

    smem = pl.BlockSpec(memory_space=pltpu.MemorySpace.SMEM)
    vmem = pl.BlockSpec(memory_space=pltpu.MemorySpace.VMEM)

    out, h_n, c_n = pl.pallas_call(
        _lstm_kernel,
        out_shape=(
            jax.ShapeDtypeStruct((1, O), jnp.float32),
            jax.ShapeDtypeStruct((1, H), jnp.float32),
            jax.ShapeDtypeStruct((1, H), jnp.float32),
        ),
        in_specs=[smem, vmem, vmem, vmem, vmem, vmem, vmem],
        out_specs=(vmem, vmem, vmem),
    )(ids, table, h0_2d, c0_2d, w_hh, w_out, b_out)

    return out, (h_n.reshape(1, 1, H), c_n.reshape(1, 1, H))


# ---------------------------------------------------------------------------
# Pure-JAX reference (same math as torch.nn.LSTM, PyTorch gate order)
# ---------------------------------------------------------------------------
def _reference_forward(indices, hidden, params):
    h, c = hidden
    H = h.shape[-1]
    h = h.reshape(1, H)
    c = c.reshape(1, H)
    x = jnp.take(params["embedding"], indices[:, 0].astype(jnp.int32), axis=0)
    for t in range(indices.shape[0]):
        gates = (x[t:t + 1] @ params["w_ih_t"]
                 + h @ params["w_hh_t"] + params["b_gates"])
        i = jax.nn.sigmoid(gates[:, 0 * H:1 * H])
        f = jax.nn.sigmoid(gates[:, 1 * H:2 * H])
        g = jnp.tanh(gates[:, 2 * H:3 * H])
        o = jax.nn.sigmoid(gates[:, 3 * H:4 * H])
        c = f * c + i * g
        h = o * jnp.tanh(c)
    logits = h @ params["w_out_t"] + params["b_out"]
    log_probs = logits - jax.scipy.special.logsumexp(logits, axis=1,
                                                     keepdims=True)
    return log_probs, (h.reshape(1, 1, H), c.reshape(1, 1, H))


def init_params(key, input_size, hidden_size, output_size):
    ks = jax.random.split(key, 7)
    s = 1.0 / np.sqrt(hidden_size)
    return {
        "embedding": jax.random.normal(ks[0], (input_size, EMB_DIM),
                                       jnp.float32),
        "w_ih_t": jax.random.uniform(ks[1], (EMB_DIM, 4 * hidden_size),
                                     jnp.float32, -s, s),
        "w_hh_t": jax.random.uniform(ks[2], (hidden_size, 4 * hidden_size),
                                     jnp.float32, -s, s),
        "b_gates": (jax.random.uniform(ks[3], (1, 4 * hidden_size),
                                       jnp.float32, -s, s)
                    + jax.random.uniform(ks[4], (1, 4 * hidden_size),
                                         jnp.float32, -s, s)),
        "w_out_t": jax.random.uniform(ks[5], (hidden_size, output_size),
                                      jnp.float32, -s, s),
        "b_out": jax.random.uniform(ks[6], (1, output_size),
                                    jnp.float32, -s, s),
    }


if __name__ == "__main__":
    input_size = 30     # vocab size (set of characters)
    hidden_size = 32    # small demo size; module allows any hidden_size
    output_size = 10
    seq_len = 8

    key = jax.random.PRNGKey(0)
    k_param, k_idx = jax.random.split(key)
    params = init_params(k_param, input_size, hidden_size, output_size)
    kparams = prepare_params(params)          # one-time, off the forward path
    kparams = jax.block_until_ready(kparams)

    # lineToTensor produces a (seq_len, 1) tensor of letter indices.
    indices = jax.random.randint(k_idx, (seq_len, 1), 0, input_size,
                                 dtype=jnp.int32)
    hidden = (jnp.zeros((1, 1, hidden_size), jnp.float32),
              jnp.zeros((1, 1, hidden_size), jnp.float32))

    out, (h_n, c_n) = lstm_forward(indices, hidden, kparams)
    out = jax.block_until_ready(out)
    h_n = jax.block_until_ready(h_n)
    c_n = jax.block_until_ready(c_n)

    ref_out, (ref_h, ref_c) = _reference_forward(indices, hidden, params)
    np.testing.assert_allclose(np.asarray(out), np.asarray(ref_out),
                               rtol=1e-4, atol=1e-4)
    np.testing.assert_allclose(np.asarray(h_n), np.asarray(ref_h),
                               rtol=1e-4, atol=1e-4)
    np.testing.assert_allclose(np.asarray(c_n), np.asarray(ref_c),
                               rtol=1e-4, atol=1e-4)
    print("KERNEL_OK")
</pallas_src>

<mosaic_0001>
module attributes {stable_mosaic.version = 11 : i64} {
  func.func @_lstm_kernel(%arg0: memref<8xi32, #tpu.memory_space<smem>>, %arg1: memref<30x128xf32, #tpu.memory_space<vmem>>, %arg2: memref<1x32xf32, #tpu.memory_space<vmem>>, %arg3: memref<1x32xf32, #tpu.memory_space<vmem>>, %arg4: memref<32x128xf32, #tpu.memory_space<vmem>>, %arg5: memref<32x10xf32, #tpu.memory_space<vmem>>, %arg6: memref<1x10xf32, #tpu.memory_space<vmem>>, %arg7: memref<1x10xf32, #tpu.memory_space<vmem>>, %arg8: memref<1x32xf32, #tpu.memory_space<vmem>>, %arg9: memref<1x32xf32, #tpu.memory_space<vmem>>) attributes {dimension_semantics = [], scalar_prefetch = 0 : i64, scratch_operands = 0 : i64, tpu.core_type = #tpu.core_type<tc>} {
    %c0 = arith.constant 0 : index
    %c0_0 = arith.constant 0 : index
    %0 = vector.load %arg4[%c0, %c0_0] : memref<32x128xf32, #tpu.memory_space<vmem>>, vector<32x128xf32>
    %c0_1 = arith.constant 0 : index
    %c0_2 = arith.constant 0 : index
    %1 = vector.load %arg2[%c0_1, %c0_2] : memref<1x32xf32, #tpu.memory_space<vmem>>, vector<1x32xf32>
    %c0_3 = arith.constant 0 : index
    %c0_4 = arith.constant 0 : index
    %2 = vector.load %arg3[%c0_3, %c0_4] : memref<1x32xf32, #tpu.memory_space<vmem>>, vector<1x32xf32>
    %c0_5 = arith.constant 0 : index
    %3 = memref.load %arg0[%c0_5] : memref<8xi32, #tpu.memory_space<smem>>
    %4 = arith.index_cast %3 : i32 to index
    %c0_6 = arith.constant 0 : index
    %5 = vector.load %arg1[%4, %c0_6] : memref<30x128xf32, #tpu.memory_space<vmem>>, vector<1x128xf32>
    %cst = arith.constant dense<0.000000e+00> : vector<1x128xf32>
    %6 = tpu.matmul %1, %0, %cst {dimension_numbers = #tpu.dot_dimension_numbers<[1], [0], [0], [1], [0, 0, 1, 1], [], []>} : vector<1x32xf32>, vector<32x128xf32>, vector<1x128xf32> -> vector<1x128xf32>
    %7 = arith.addf %6, %5 : vector<1x128xf32>
    %8 = math.tanh %7 : vector<1x128xf32>
    %9 = vector.extract_strided_slice %8 {offsets = [0, 0], sizes = [1, 32], strides = [1, 1]} : vector<1x128xf32> to vector<1x32xf32>
    %cst_7 = arith.constant 1.000000e+00 : f32
    %10 = vector.broadcast %cst_7 : f32 to vector<1x32xf32>
    %11 = arith.addf %9, %10 : vector<1x32xf32>
    %cst_8 = arith.constant 5.000000e-01 : f32
    %12 = vector.broadcast %cst_8 : f32 to vector<1x32xf32>
    %13 = arith.mulf %12, %11 : vector<1x32xf32>
    %14 = vector.extract_strided_slice %8 {offsets = [0, 32], sizes = [1, 32], strides = [1, 1]} : vector<1x128xf32> to vector<1x32xf32>
    %cst_9 = arith.constant 1.000000e+00 : f32
    %15 = vector.broadcast %cst_9 : f32 to vector<1x32xf32>
    %16 = arith.addf %14, %15 : vector<1x32xf32>
    %cst_10 = arith.constant 5.000000e-01 : f32
    %17 = vector.broadcast %cst_10 : f32 to vector<1x32xf32>
    %18 = arith.mulf %17, %16 : vector<1x32xf32>
    %19 = vector.extract_strided_slice %8 {offsets = [0, 64], sizes = [1, 32], strides = [1, 1]} : vector<1x128xf32> to vector<1x32xf32>
    %cst_11 = arith.constant 1.000000e+00 : f32
    %20 = vector.broadcast %cst_11 : f32 to vector<1x32xf32>
    %21 = arith.addf %19, %20 : vector<1x32xf32>
    %cst_12 = arith.constant 5.000000e-01 : f32
    %22 = vector.broadcast %cst_12 : f32 to vector<1x32xf32>
    %23 = arith.mulf %22, %21 : vector<1x32xf32>
    %24 = vector.extract_strided_slice %8 {offsets = [0, 96], sizes = [1, 32], strides = [1, 1]} : vector<1x128xf32> to vector<1x32xf32>
    %25 = arith.mulf %18, %2 : vector<1x32xf32>
    %26 = arith.mulf %13, %24 : vector<1x32xf32>
    %27 = arith.addf %25, %26 : vector<1x32xf32>
    %28 = math.tanh %27 : vector<1x32xf32>
    %29 = arith.mulf %23, %28 : vector<1x32xf32>
    %c1 = arith.constant 1 : index
    %30 = memref.load %arg0[%c1] : memref<8xi32, #tpu.memory_space<smem>>
    %31 = arith.index_cast %30 : i32 to index
    %c0_13 = arith.constant 0 : index
    %32 = vector.load %arg1[%31, %c0_13] : memref<30x128xf32, #tpu.memory_space<vmem>>, vector<1x128xf32>
    %cst_14 = arith.constant dense<0.000000e+00> : vector<1x128xf32>
    %33 = tpu.matmul %29, %0, %cst_14 {dimension_numbers = #tpu.dot_dimension_numbers<[1], [0], [0], [1], [0, 0, 1, 1], [], []>} : vector<1x32xf32>, vector<32x128xf32>, vector<1x128xf32> -> vector<1x128xf32>
    %34 = arith.addf %33, %32 : vector<1x128xf32>
    %35 = math.tanh %34 : vector<1x128xf32>
    %36 = vector.extract_strided_slice %35 {offsets = [0, 0], sizes = [1, 32], strides = [1, 1]} : vector<1x128xf32> to vector<1x32xf32>
    %cst_15 = arith.constant 1.000000e+00 : f32
    %37 = vector.broadcast %cst_15 : f32 to vector<1x32xf32>
    %38 = arith.addf %36, %37 : vector<1x32xf32>
    %cst_16 = arith.constant 5.000000e-01 : f32
    %39 = vector.broadcast %cst_16 : f32 to vector<1x32xf32>
    %40 = arith.mulf %39, %38 : vector<1x32xf32>
    %41 = vector.extract_strided_slice %35 {offsets = [0, 32], sizes = [1, 32], strides = [1, 1]} : vector<1x128xf32> to vector<1x32xf32>
    %cst_17 = arith.constant 1.000000e+00 : f32
    %42 = vector.broadcast %cst_17 : f32 to vector<1x32xf32>
    %43 = arith.addf %41, %42 : vector<1x32xf32>
    %cst_18 = arith.constant 5.000000e-01 : f32
    %44 = vector.broadcast %cst_18 : f32 to vector<1x32xf32>
    %45 = arith.mulf %44, %43 : vector<1x32xf32>
    %46 = vector.extract_strided_slice %35 {offsets = [0, 64], sizes = [1, 32], strides = [1, 1]} : vector<1x128xf32> to vector<1x32xf32>
    %cst_19 = arith.constant 1.000000e+00 : f32
    %47 = vector.broadcast %cst_19 : f32 to vector<1x32xf32>
    %48 = arith.addf %46, %47 : vector<1x32xf32>
    %cst_20 = arith.constant 5.000000e-01 : f32
    %49 = vector.broadcast %cst_20 : f32 to vector<1x32xf32>
    %50 = arith.mulf %49, %48 : vector<1x32xf32>
    %51 = vector.extract_strided_slice %35 {offsets = [0, 96], sizes = [1, 32], strides = [1, 1]} : vector<1x128xf32> to vector<1x32xf32>
    %52 = arith.mulf %45, %27 : vector<1x32xf32>
    %53 = arith.mulf %40, %51 : vector<1x32xf32>
    %54 = arith.addf %52, %53 : vector<1x32xf32>
    %55 = math.tanh %54 : vector<1x32xf32>
    %56 = arith.mulf %50, %55 : vector<1x32xf32>
    %c2 = arith.constant 2 : index
    %57 = memref.load %arg0[%c2] : memref<8xi32, #tpu.memory_space<smem>>
    %58 = arith.index_cast %57 : i32 to index
    %c0_21 = arith.constant 0 : index
    %59 = vector.load %arg1[%58, %c0_21] : memref<30x128xf32, #tpu.memory_space<vmem>>, vector<1x128xf32>
    %cst_22 = arith.constant dense<0.000000e+00> : vector<1x128xf32>
    %60 = tpu.matmul %56, %0, %cst_22 {dimension_numbers = #tpu.dot_dimension_numbers<[1], [0], [0], [1], [0, 0, 1, 1], [], []>} : vector<1x32xf32>, vector<32x128xf32>, vector<1x128xf32> -> vector<1x128xf32>
    %61 = arith.addf %60, %59 : vector<1x128xf32>
    %62 = math.tanh %61 : vector<1x128xf32>
    %63 = vector.extract_strided_slice %62 {offsets = [0, 0], sizes = [1, 32], strides = [1, 1]} : vector<1x128xf32> to vector<1x32xf32>
    %cst_23 = arith.constant 1.000000e+00 : f32
    %64 = vector.broadcast %cst_23 : f32 to vector<1x32xf32>
    %65 = arith.addf %63, %64 : vector<1x32xf32>
    %cst_24 = arith.constant 5.000000e-01 : f32
    %66 = vector.broadcast %cst_24 : f32 to vector<1x32xf32>
    %67 = arith.mulf %66, %65 : vector<1x32xf32>
    %68 = vector.extract_strided_slice %62 {offsets = [0, 32], sizes = [1, 32], strides = [1, 1]} : vector<1x128xf32> to vector<1x32xf32>
    %cst_25 = arith.constant 1.000000e+00 : f32
    %69 = vector.broadcast %cst_25 : f32 to vector<1x32xf32>
    %70 = arith.addf %68, %69 : vector<1x32xf32>
    %cst_26 = arith.constant 5.000000e-01 : f32
    %71 = vector.broadcast %cst_26 : f32 to vector<1x32xf32>
    %72 = arith.mulf %71, %70 : vector<1x32xf32>
    %73 = vector.extract_strided_slice %62 {offsets = [0, 64], sizes = [1, 32], strides = [1, 1]} : vector<1x128xf32> to vector<1x32xf32>
    %cst_27 = arith.constant 1.000000e+00 : f32
    %74 = vector.broadcast %cst_27 : f32 to vector<1x32xf32>
    %75 = arith.addf %73, %74 : vector<1x32xf32>
    %cst_28 = arith.constant 5.000000e-01 : f32
    %76 = vector.broadcast %cst_28 : f32 to vector<1x32xf32>
    %77 = arith.mulf %76, %75 : vector<1x32xf32>
    %78 = vector.extract_strided_slice %62 {offsets = [0, 96], sizes = [1, 32], strides = [1, 1]} : vector<1x128xf32> to vector<1x32xf32>
    %79 = arith.mulf %72, %54 : vector<1x32xf32>
    %80 = arith.mulf %67, %78 : vector<1x32xf32>
    %81 = arith.addf %79, %80 : vector<1x32xf32>
    %82 = math.tanh %81 : vector<1x32xf32>
    %83 = arith.mulf %77, %82 : vector<1x32xf32>
    %c3 = arith.constant 3 : index
    %84 = memref.load %arg0[%c3] : memref<8xi32, #tpu.memory_space<smem>>
    %85 = arith.index_cast %84 : i32 to index
    %c0_29 = arith.constant 0 : index
    %86 = vector.load %arg1[%85, %c0_29] : memref<30x128xf32, #tpu.memory_space<vmem>>, vector<1x128xf32>
    %cst_30 = arith.constant dense<0.000000e+00> : vector<1x128xf32>
    %87 = tpu.matmul %83, %0, %cst_30 {dimension_numbers = #tpu.dot_dimension_numbers<[1], [0], [0], [1], [0, 0, 1, 1], [], []>} : vector<1x32xf32>, vector<32x128xf32>, vector<1x128xf32> -> vector<1x128xf32>
    %88 = arith.addf %87, %86 : vector<1x128xf32>
    %89 = math.tanh %88 : vector<1x128xf32>
    %90 = vector.extract_strided_slice %89 {offsets = [0, 0], sizes = [1, 32], strides = [1, 1]} : vector<1x128xf32> to vector<1x32xf32>
    %cst_31 = arith.constant 1.000000e+00 : f32
    %91 = vector.broadcast %cst_31 : f32 to vector<1x32xf32>
    %92 = arith.addf %90, %91 : vector<1x32xf32>
    %cst_32 = arith.constant 5.000000e-01 : f32
    %93 = vector.broadcast %cst_32 : f32 to vector<1x32xf32>
    %94 = arith.mulf %93, %92 : vector<1x32xf32>
    %95 = vector.extract_strided_slice %89 {offsets = [0, 32], sizes = [1, 32], strides = [1, 1]} : vector<1x128xf32> to vector<1x32xf32>
    %cst_33 = arith.constant 1.000000e+00 : f32
    %96 = vector.broadcast %cst_33 : f32 to vector<1x32xf32>
    %97 = arith.addf %95, %96 : vector<1x32xf32>
    %cst_34 = arith.constant 5.000000e-01 : f32
    %98 = vector.broadcast %cst_34 : f32 to vector<1x32xf32>
    %99 = arith.mulf %98, %97 : vector<1x32xf32>
    %100 = vector.extract_strided_slice %89 {offsets = [0, 64], sizes = [1, 32], strides = [1, 1]} : vector<1x128xf32> to vector<1x32xf32>
    %cst_35 = arith.constant 1.000000e+00 : f32
    %101 = vector.broadcast %cst_35 : f32 to vector<1x32xf32>
    %102 = arith.addf %100, %101 : vector<1x32xf32>
    %cst_36 = arith.constant 5.000000e-01 : f32
    %103 = vector.broadcast %cst_36 : f32 to vector<1x32xf32>
    %104 = arith.mulf %103, %102 : vector<1x32xf32>
    %105 = vector.extract_strided_slice %89 {offsets = [0, 96], sizes = [1, 32], strides = [1, 1]} : vector<1x128xf32> to vector<1x32xf32>
    %106 = arith.mulf %99, %81 : vector<1x32xf32>
    %107 = arith.mulf %94, %105 : vector<1x32xf32>
    %108 = arith.addf %106, %107 : vector<1x32xf32>
    %109 = math.tanh %108 : vector<1x32xf32>
    %110 = arith.mulf %104, %109 : vector<1x32xf32>
    %c4 = arith.constant 4 : index
    %111 = memref.load %arg0[%c4] : memref<8xi32, #tpu.memory_space<smem>>
    %112 = arith.index_cast %111 : i32 to index
    %c0_37 = arith.constant 0 : index
    %113 = vector.load %arg1[%112, %c0_37] : memref<30x128xf32, #tpu.memory_space<vmem>>, vector<1x128xf32>
    %cst_38 = arith.constant dense<0.000000e+00> : vector<1x128xf32>
    %114 = tpu.matmul %110, %0, %cst_38 {dimension_numbers = #tpu.dot_dimension_numbers<[1], [0], [0], [1], [0, 0, 1, 1], [], []>} : vector<1x32xf32>, vector<32x128xf32>, vector<1x128xf32> -> vector<1x128xf32>
    %115 = arith.addf %114, %113 : vector<1x128xf32>
    %116 = math.tanh %115 : vector<1x128xf32>
    %117 = vector.extract_strided_slice %116 {offsets = [0, 0], sizes = [1, 32], strides = [1, 1]} : vector<1x128xf32> to vector<1x32xf32>
    %cst_39 = arith.constant 1.000000e+00 : f32
    %118 = vector.broadcast %cst_39 : f32 to vector<1x32xf32>
    %119 = arith.addf %117, %118 : vector<1x32xf32>
    %cst_40 = arith.constant 5.000000e-01 : f32
    %120 = vector.broadcast %cst_40 : f32 to vector<1x32xf32>
    %121 = arith.mulf %120, %119 : vector<1x32xf32>
    %122 = vector.extract_strided_slice %116 {offsets = [0, 32], sizes = [1, 32], strides = [1, 1]} : vector<1x128xf32> to vector<1x32xf32>
    %cst_41 = arith.constant 1.000000e+00 : f32
    %123 = vector.broadcast %cst_41 : f32 to vector<1x32xf32>
    %124 = arith.addf %122, %123 : vector<1x32xf32>
    %cst_42 = arith.constant 5.000000e-01 : f32
    %125 = vector.broadcast %cst_42 : f32 to vector<1x32xf32>
    %126 = arith.mulf %125, %124 : vector<1x32xf32>
    %127 = vector.extract_strided_slice %116 {offsets = [0, 64], sizes = [1, 32], strides = [1, 1]} : vector<1x128xf32> to vector<1x32xf32>
    %cst_43 = arith.constant 1.000000e+00 : f32
    %128 = vector.broadcast %cst_43 : f32 to vector<1x32xf32>
    %129 = arith.addf %127, %128 : vector<1x32xf32>
    %cst_44 = arith.constant 5.000000e-01 : f32
    %130 = vector.broadcast %cst_44 : f32 to vector<1x32xf32>
    %131 = arith.mulf %130, %129 : vector<1x32xf32>
    %132 = vector.extract_strided_slice %116 {offsets = [0, 96], sizes = [1, 32], strides = [1, 1]} : vector<1x128xf32> to vector<1x32xf32>
    %133 = arith.mulf %126, %108 : vector<1x32xf32>
    %134 = arith.mulf %121, %132 : vector<1x32xf32>
    %135 = arith.addf %133, %134 : vector<1x32xf32>
    %136 = math.tanh %135 : vector<1x32xf32>
    %137 = arith.mulf %131, %136 : vector<1x32xf32>
    %c5 = arith.constant 5 : index
    %138 = memref.load %arg0[%c5] : memref<8xi32, #tpu.memory_space<smem>>
    %139 = arith.index_cast %138 : i32 to index
    %c0_45 = arith.constant 0 : index
    %140 = vector.load %arg1[%139, %c0_45] : memref<30x128xf32, #tpu.memory_space<vmem>>, vector<1x128xf32>
    %cst_46 = arith.constant dense<0.000000e+00> : vector<1x128xf32>
    %141 = tpu.matmul %137, %0, %cst_46 {dimension_numbers = #tpu.dot_dimension_numbers<[1], [0], [0], [1], [0, 0, 1, 1], [], []>} : vector<1x32xf32>, vector<32x128xf32>, vector<1x128xf32> -> vector<1x128xf32>
    %142 = arith.addf %141, %140 : vector<1x128xf32>
    %143 = math.tanh %142 : vector<1x128xf32>
    %144 = vector.extract_strided_slice %143 {offsets = [0, 0], sizes = [1, 32], strides = [1, 1]} : vector<1x128xf32> to vector<1x32xf32>
    %cst_47 = arith.constant 1.000000e+00 : f32
    %145 = vector.broadcast %cst_47 : f32 to vector<1x32xf32>
    %146 = arith.addf %144, %145 : vector<1x32xf32>
    %cst_48 = arith.constant 5.000000e-01 : f32
    %147 = vector.broadcast %cst_48 : f32 to vector<1x32xf32>
    %148 = arith.mulf %147, %146 : vector<1x32xf32>
    %149 = vector.extract_strided_slice %143 {offsets = [0, 32], sizes = [1, 32], strides = [1, 1]} : vector<1x128xf32> to vector<1x32xf32>
    %cst_49 = arith.constant 1.000000e+00 : f32
    %150 = vector.broadcast %cst_49 : f32 to vector<1x32xf32>
    %151 = arith.addf %149, %150 : vector<1x32xf32>
    %cst_50 = arith.constant 5.000000e-01 : f32
    %152 = vector.broadcast %cst_50 : f32 to vector<1x32xf32>
    %153 = arith.mulf %152, %151 : vector<1x32xf32>
    %154 = vector.extract_strided_slice %143 {offsets = [0, 64], sizes = [1, 32], strides = [1, 1]} : vector<1x128xf32> to vector<1x32xf32>
    %cst_51 = arith.constant 1.000000e+00 : f32
    %155 = vector.broadcast %cst_51 : f32 to vector<1x32xf32>
    %156 = arith.addf %154, %155 : vector<1x32xf32>
    %cst_52 = arith.constant 5.000000e-01 : f32
    %157 = vector.broadcast %cst_52 : f32 to vector<1x32xf32>
    %158 = arith.mulf %157, %156 : vector<1x32xf32>
    %159 = vector.extract_strided_slice %143 {offsets = [0, 96], sizes = [1, 32], strides = [1, 1]} : vector<1x128xf32> to vector<1x32xf32>
    %160 = arith.mulf %153, %135 : vector<1x32xf32>
    %161 = arith.mulf %148, %159 : vector<1x32xf32>
    %162 = arith.addf %160, %161 : vector<1x32xf32>
    %163 = math.tanh %162 : vector<1x32xf32>
    %164 = arith.mulf %158, %163 : vector<1x32xf32>
    %c6 = arith.constant 6 : index
    %165 = memref.load %arg0[%c6] : memref<8xi32, #tpu.memory_space<smem>>
    %166 = arith.index_cast %165 : i32 to index
    %c0_53 = arith.constant 0 : index
    %167 = vector.load %arg1[%166, %c0_53] : memref<30x128xf32, #tpu.memory_space<vmem>>, vector<1x128xf32>
    %cst_54 = arith.constant dense<0.000000e+00> : vector<1x128xf32>
    %168 = tpu.matmul %164, %0, %cst_54 {dimension_numbers = #tpu.dot_dimension_numbers<[1], [0], [0], [1], [0, 0, 1, 1], [], []>} : vector<1x32xf32>, vector<32x128xf32>, vector<1x128xf32> -> vector<1x128xf32>
    %169 = arith.addf %168, %167 : vector<1x128xf32>
    %170 = math.tanh %169 : vector<1x128xf32>
    %171 = vector.extract_strided_slice %170 {offsets = [0, 0], sizes = [1, 32], strides = [1, 1]} : vector<1x128xf32> to vector<1x32xf32>
    %cst_55 = arith.constant 1.000000e+00 : f32
    %172 = vector.broadcast %cst_55 : f32 to vector<1x32xf32>
    %173 = arith.addf %171, %172 : vector<1x32xf32>
    %cst_56 = arith.constant 5.000000e-01 : f32
    %174 = vector.broadcast %cst_56 : f32 to vector<1x32xf32>
    %175 = arith.mulf %174, %173 : vector<1x32xf32>
    %176 = vector.extract_strided_slice %170 {offsets = [0, 32], sizes = [1, 32], strides = [1, 1]} : vector<1x128xf32> to vector<1x32xf32>
    %cst_57 = arith.constant 1.000000e+00 : f32
    %177 = vector.broadcast %cst_57 : f32 to vector<1x32xf32>
    %178 = arith.addf %176, %177 : vector<1x32xf32>
    %cst_58 = arith.constant 5.000000e-01 : f32
    %179 = vector.broadcast %cst_58 : f32 to vector<1x32xf32>
    %180 = arith.mulf %179, %178 : vector<1x32xf32>
    %181 = vector.extract_strided_slice %170 {offsets = [0, 64], sizes = [1, 32], strides = [1, 1]} : vector<1x128xf32> to vector<1x32xf32>
    %cst_59 = arith.constant 1.000000e+00 : f32
    %182 = vector.broadcast %cst_59 : f32 to vector<1x32xf32>
    %183 = arith.addf %181, %182 : vector<1x32xf32>
    %cst_60 = arith.constant 5.000000e-01 : f32
    %184 = vector.broadcast %cst_60 : f32 to vector<1x32xf32>
    %185 = arith.mulf %184, %183 : vector<1x32xf32>
    %186 = vector.extract_strided_slice %170 {offsets = [0, 96], sizes = [1, 32], strides = [1, 1]} : vector<1x128xf32> to vector<1x32xf32>
    %187 = arith.mulf %180, %162 : vector<1x32xf32>
    %188 = arith.mulf %175, %186 : vector<1x32xf32>
    %189 = arith.addf %187, %188 : vector<1x32xf32>
    %190 = math.tanh %189 : vector<1x32xf32>
    %191 = arith.mulf %185, %190 : vector<1x32xf32>
    %c7 = arith.constant 7 : index
    %192 = memref.load %arg0[%c7] : memref<8xi32, #tpu.memory_space<smem>>
    %193 = arith.index_cast %192 : i32 to index
    %c0_61 = arith.constant 0 : index
    %194 = vector.load %arg1[%193, %c0_61] : memref<30x128xf32, #tpu.memory_space<vmem>>, vector<1x128xf32>
    %cst_62 = arith.constant dense<0.000000e+00> : vector<1x128xf32>
    %195 = tpu.matmul %191, %0, %cst_62 {dimension_numbers = #tpu.dot_dimension_numbers<[1], [0], [0], [1], [0, 0, 1, 1], [], []>} : vector<1x32xf32>, vector<32x128xf32>, vector<1x128xf32> -> vector<1x128xf32>
    %196 = arith.addf %195, %194 : vector<1x128xf32>
    %197 = math.tanh %196 : vector<1x128xf32>
    %198 = vector.extract_strided_slice %197 {offsets = [0, 0], sizes = [1, 32], strides = [1, 1]} : vector<1x128xf32> to vector<1x32xf32>
    %cst_63 = arith.constant 1.000000e+00 : f32
    %199 = vector.broadcast %cst_63 : f32 to vector<1x32xf32>
    %200 = arith.addf %198, %199 : vector<1x32xf32>
    %cst_64 = arith.constant 5.000000e-01 : f32
    %201 = vector.broadcast %cst_64 : f32 to vector<1x32xf32>
    %202 = arith.mulf %201, %200 : vector<1x32xf32>
    %203 = vector.extract_strided_slice %197 {offsets = [0, 32], sizes = [1, 32], strides = [1, 1]} : vector<1x128xf32> to vector<1x32xf32>
    %cst_65 = arith.constant 1.000000e+00 : f32
    %204 = vector.broadcast %cst_65 : f32 to vector<1x32xf32>
    %205 = arith.addf %203, %204 : vector<1x32xf32>
    %cst_66 = arith.constant 5.000000e-01 : f32
    %206 = vector.broadcast %cst_66 : f32 to vector<1x32xf32>
    %207 = arith.mulf %206, %205 : vector<1x32xf32>
    %208 = vector.extract_strided_slice %197 {offsets = [0, 64], sizes = [1, 32], strides = [1, 1]} : vector<1x128xf32> to vector<1x32xf32>
    %cst_67 = arith.constant 1.000000e+00 : f32
    %209 = vector.broadcast %cst_67 : f32 to vector<1x32xf32>
    %210 = arith.addf %208, %209 : vector<1x32xf32>
    %cst_68 = arith.constant 5.000000e-01 : f32
    %211 = vector.broadcast %cst_68 : f32 to vector<1x32xf32>
    %212 = arith.mulf %211, %210 : vector<1x32xf32>
    %213 = vector.extract_strided_slice %197 {offsets = [0, 96], sizes = [1, 32], strides = [1, 1]} : vector<1x128xf32> to vector<1x32xf32>
    %214 = arith.mulf %207, %189 : vector<1x32xf32>
    %215 = arith.mulf %202, %213 : vector<1x32xf32>
    %216 = arith.addf %214, %215 : vector<1x32xf32>
    %217 = math.tanh %216 : vector<1x32xf32>
    %218 = arith.mulf %212, %217 : vector<1x32xf32>
    %c0_69 = arith.constant 0 : index
    %c0_70 = arith.constant 0 : index
    %219 = vector.load %arg5[%c0_69, %c0_70] : memref<32x10xf32, #tpu.memory_space<vmem>>, vector<32x10xf32>
    %cst_71 = arith.constant dense<0.000000e+00> : vector<1x10xf32>
    %220 = tpu.matmul %218, %219, %cst_71 {dimension_numbers = #tpu.dot_dimension_numbers<[1], [0], [0], [1], [0, 0, 1, 1], [], []>} : vector<1x32xf32>, vector<32x10xf32>, vector<1x10xf32> -> vector<1x10xf32>
    %c0_72 = arith.constant 0 : index
    %c0_73 = arith.constant 0 : index
    %221 = vector.load %arg6[%c0_72, %c0_73] : memref<1x10xf32, #tpu.memory_space<vmem>>, vector<1x10xf32>
    %222 = arith.addf %220, %221 : vector<1x10xf32>
    %cst_74 = arith.constant dense<0xFF800000> : vector<1xf32>
    %223 = vector.multi_reduction <maximumf>, %222, %cst_74 [1] : vector<1x10xf32> to vector<1xf32>
    %224 = vector.shape_cast %223 : vector<1xf32> to vector<1x1xf32>
    %225 = vector.broadcast %224 : vector<1x1xf32> to vector<1x10xf32>
    %226 = arith.subf %222, %225 : vector<1x10xf32>
    %227 = math.exp %226 : vector<1x10xf32>
    %cst_75 = arith.constant dense<0.000000e+00> : vector<1xf32>
    %228 = vector.multi_reduction <add>, %227, %cst_75 [1] : vector<1x10xf32> to vector<1xf32>
    %229 = vector.shape_cast %228 : vector<1xf32> to vector<1x1xf32>
    %230 = math.log %229 : vector<1x1xf32>
    %231 = arith.addf %230, %224 : vector<1x1xf32>
    %232 = vector.broadcast %231 : vector<1x1xf32> to vector<1x10xf32>
    %233 = arith.subf %222, %232 : vector<1x10xf32>
    %c0_76 = arith.constant 0 : index
    %c0_77 = arith.constant 0 : index
    %234 = vector.load %arg7[%c0_76, %c0_77] : memref<1x10xf32, #tpu.memory_space<vmem>>, vector<1x10xf32>
    tpu.vector_store %arg7[%c0_76, %c0_77], %233 {strides = array<i32>} : memref<1x10xf32, #tpu.memory_space<vmem>>, vector<1x10xf32>,
    %c0_78 = arith.constant 0 : index
    %c0_79 = arith.constant 0 : index
    %235 = vector.load %arg8[%c0_78, %c0_79] : memref<1x32xf32, #tpu.memory_space<vmem>>, vector<1x32xf32>
    tpu.vector_store %arg8[%c0_78, %c0_79], %218 {strides = array<i32>} : memref<1x32xf32, #tpu.memory_space<vmem>>, vector<1x32xf32>,
    %c0_80 = arith.constant 0 : index
    %c0_81 = arith.constant 0 : index
    %236 = vector.load %arg9[%c0_80, %c0_81] : memref<1x32xf32, #tpu.memory_space<vmem>>, vector<1x32xf32>
    tpu.vector_store %arg9[%c0_80, %c0_81], %216 {strides = array<i32>} : memref<1x32xf32, #tpu.memory_space<vmem>>, vector<1x32xf32>,
    return
  }
}

</mosaic_0001>

<llo_original>
// kernel: lstm_forward.1
$region0: #{lstm_forward.1}
  #allocation0 [shape = 'u32[]', space=smem, size = 0x4, offset = 0x4, fixed_abs, tag = 'smem constant byte address 0x4 - core index']
  #allocation1 [shape = 'u32[144,128]{1,0:T(1,128)}', space=vmem, size = 0x12000, scoped, tag = 'internal scratch']
  %s0 = inlined_call_operand.vmem [shape: s32[8], index: 0, kind: input, shape index: {}]
  %s1 = inlined_call_operand.vmem [shape: f32[30,128], index: 1, kind: input, shape index: {}]
  %s2 = inlined_call_operand.vmem [shape: f32[1,32], index: 2, kind: input, shape index: {}]
  %s3 = inlined_call_operand.vmem [shape: f32[1,32], index: 3, kind: input, shape index: {}]
  %s4 = inlined_call_operand.hbm [shape: f32[32,128], index: 4, kind: input, shape index: {}]
  %s5 = inlined_call_operand.vmem [shape: f32[32,10], index: 5, kind: input, shape index: {}]
  %s6 = inlined_call_operand.vmem [shape: f32[1,10], index: 6, kind: input, shape index: {}]
  %s7 = inlined_call_operand.hbm [shape: f32[1,10], index: 7, kind: output, shape index: {0}]
  %s8 = inlined_call_operand.hbm [shape: f32[1,32], index: 8, kind: output, shape index: {1}]
  %s9 = inlined_call_operand.hbm [shape: f32[1,32], index: 9, kind: output, shape index: {2}]
  %10 = xla_tuple %s7, %s8, %s9
  %s11 = sld [smem:[#allocation0]]
  $region62: #{lstm_forward.1} parent=0
    _
  %s13 = ssub.s32 1, %s11
  %s14 = scalar_select 0, %s13, %s11
  $region1: #{lstm_forward.1} parent=0
    #allocation2 [shape = 'u8[512]{0}', space=smem, size = 0x200, scoped, tag = 'input window, operand 0, single buffered']
    #allocation3 [shape = 's32[1]{0}', space=sflag, size = 0x4, scoped, tag = 'scoped memory for lstm_forward.1']
    #allocation4 [shape = 's32[1]{0}', space=sflag, size = 0x4, scoped, tag = 'scoped memory for lstm_forward.1']
    #allocation5 [shape = 's32[1]{0}', space=sflag, size = 0x4, scoped, tag = 'scoped memory for lstm_forward.1']
    #allocation6 [shape = 'u8[16384]{0}', space=vmem, size = 0x4000, scoped, tag = 'input window, operand 4, single buffered']
    #allocation7 [shape = 'u8[512]{0}', space=vmem, size = 0x400, scoped, tag = 'output window, operand 0, single buffered']
    #allocation8 [shape = 'u8[512]{0}', space=vmem, size = 0x400, scoped, tag = 'output window, operand 1, single buffered']
    #allocation9 [shape = 's32[1]{0}', space=sflag, size = 0x4, scoped, tag = 'scoped memory for lstm_forward.1']
    #allocation10 [shape = 'u8[512]{0}', space=vmem, size = 0x400, scoped, tag = 'output window, operand 2, single buffered']
    %15 = vsyncpa [#allocation5], 0
    %16 = vsyncpa [#allocation3], 0
    %17 = vsyncpa [#allocation4], 0
    %18 = vsyncpa [#allocation9], 0
    // Predicated region
    $region2: #{lstm_forward.1} parent=1 // pred_check
      _
    $region3: #{lstm_forward.1} parent=1 // pred_check_branch
      %20 = sbr.rel (0) target = $region5
    $region4: #{lstm_forward.1} parent=1 // pred_region
      %s22 = ssub.s32 16, 16
      %23 = vsyncadd [#allocation5], %s22
      %s25 = sshll.u32 %s0, 4
      %s26 = int_to_ptr.vmem [resolvable:$true] %s25
      %28 = dma.vmem_to_smem %s26, 16, [#allocation2], [#allocation5]
    $region5: #{lstm_forward.1} parent=1 // pred_fallthru
      _
    // Predicated region
    $region6: #{lstm_forward.1} parent=1 // pred_check
      _
    $region7: #{lstm_forward.1} parent=1 // pred_check_branch
      %30 = sbr.rel (0) target = $region9
    $region8: #{lstm_forward.1} parent=1 // pred_region
      _
    $region9: #{lstm_forward.1} parent=1 // pred_fallthru
      _
    // Predicated region
    $region10: #{lstm_forward.1} parent=1 // pred_check
      _
    $region11: #{lstm_forward.1} parent=1 // pred_check_branch
      %32 = sbr.rel (0) target = $region13
    $region12: #{lstm_forward.1} parent=1 // pred_region
      _
    $region13: #{lstm_forward.1} parent=1 // pred_fallthru
      _
    // Predicated region
    $region14: #{lstm_forward.1} parent=1 // pred_check
      _
    $region15: #{lstm_forward.1} parent=1 // pred_check_branch
      %34 = sbr.rel (0) target = $region17
    $region16: #{lstm_forward.1} parent=1 // pred_region
      _
    $region17: #{lstm_forward.1} parent=1 // pred_fallthru
      _
    // Predicated region
    $region18: #{lstm_forward.1} parent=1 // pred_check
      _
    $region19: #{lstm_forward.1} parent=1 // pred_check_branch
      %36 = sbr.rel (0) target = $region21
    $region20: #{lstm_forward.1} parent=1 // pred_region
      %s38 = ssub.s32 512, 512
      %39 = vsyncadd [#allocation3], %s38
      %s40 = sshll.u32 [#allocation6], 4
      %s41 = int_to_ptr.vmem [resolvable:$true] %s40
      %46 = dma.hbm_to_vmem [thread:$0]  %s4, 512, %s41, [#allocation3], 128, 128, 8
    $region21: #{lstm_forward.1} parent=1 // pred_fallthru
      _
    // Predicated region
    $region22: #{lstm_forward.1} parent=1 // pred_check
      _
    $region23: #{lstm_forward.1} parent=1 // pred_check_branch
      %48 = sbr.rel (0) target = $region25
    $region24: #{lstm_forward.1} parent=1 // pred_region
      _
    $region25: #{lstm_forward.1} parent=1 // pred_fallthru
      _
    // Predicated region
    $region26: #{lstm_forward.1} parent=1 // pred_check
      _
    $region27: #{lstm_forward.1} parent=1 // pred_check_branch
      %50 = sbr.rel (0) target = $region29
    $region28: #{lstm_forward.1} parent=1 // pred_region
      _
    $region29: #{lstm_forward.1} parent=1 // pred_fallthru
      _
    // Predicated region
    $region30: #{lstm_forward.1} parent=1 // pred_check
      _
    $region31: #{lstm_forward.1} parent=1 // pred_check_branch
      %52 = sbr.rel (0) target = $region33
    $region32: #{lstm_forward.1} parent=1 // pred_region
      %53 = dma.done [#allocation5], 16
    $region33: #{lstm_forward.1} parent=1 // pred_fallthru
      _
    // Predicated region
    $region34: #{lstm_forward.1} parent=1 // pred_check
      _
    $region35: #{lstm_forward.1} parent=1 // pred_check_branch
      %55 = sbr.rel (0) target = $region37
    $region36: #{lstm_forward.1} parent=1 // pred_region
      %56 = dma.done [#allocation3], 512
    $region37: #{lstm_forward.1} parent=1 // pred_fallthru
      _
    %57 = sfence
    %v58 = vld [vmem:[#allocation6] sm:$0xff]
    %v59 = vld [vmem:[#allocation6 + $0x8] sm:$0xff]
    %v60 = vld [vmem:[#allocation6 + $0x10] sm:$0xff]
    %v61 = vld [vmem:[#allocation6 + $0x18] sm:$0xff]
    %v62 = vld [vmem:[%s2] sm:$0x1]
    %v63 = vld [vmem:[%s3] sm:$0x1]
    %s64 = sld [smem:[#allocation2]]
    %s65 = scalar_lea.vmem %s1, %s64
    %v66 = vld [vmem:[%s65] sm:$0x1]
    %vm67 = vcmask 261120
    %v69 = vsel %vm67, %v62, 0
    %71 = vmatprep.subr.mxu0 0.0
    %72 = vmatpush1.msra.mxu0 0.0
    %73 = vmatprep.subr.mxu0 0.0
    %74 = vmatpush1.msra.mxu0 0.0
    %75 = vmatprep.subr.mxu0 0.0
    %76 = vmatpush1.msra.mxu0 0.0
    %77 = vmatprep.subr.mxu0 0.0
    %78 = vmatpush1.msra.mxu0 0.0
    %79 = vmatprep.subr.mxu0 0.0
    %80 = vmatpush1.msra.mxu0 0.0
    %81 = vmatprep.subr.mxu0 0.0
    %82 = vmatpush1.msra.mxu0 0.0
    %83 = vmatprep.subr.mxu0 0.0
    %84 = vmatpush1.msra.mxu0 0.0
    %85 = vmatprep.subr.mxu0 0.0
    %86 = vmatpush1.msra.mxu0 0.0
    %87 = vmatprep.subr.mxu0 0.0
    %88 = vmatpush1.msra.mxu0 0.0
    %89 = vmatprep.subr.mxu0 0.0
    %90 = vmatpush1.msra.mxu0 0.0
    %91 = vmatprep.subr.mxu0 0.0
    %92 = vmatpush1.msra.mxu0 0.0
    %93 = vmatprep.subr.mxu0 0.0
    %94 = vmatpush1.msra.mxu0 0.0
    %95 = vmatprep.subr.mxu0 0.0
    %96 = vmatpush1.msra.mxu0 %v61
    %97 = vmatprep.subr.mxu0 0.0
    %98 = vmatpush1.msra.mxu0 %v60
    %99 = vmatprep.subr.mxu0 0.0
    %100 = vmatpush1.msra.mxu0 %v59
    %101 = vmatprep.subr.mxu0 0.0
    %102 = vmatpush1.msra.mxu0 %v58
    %103 = vmatprep.subr.mxu0 0.0
    %104 = vmatpush2.msra.mxu0 0.0
    %105 = vmatprep.subr.mxu0 0.0
    %106 = vmatpush2.msra.mxu0 0.0
    %107 = vmatprep.subr.mxu0 0.0
    %108 = vmatpush2.msra.mxu0 0.0
    %109 = vmatprep.subr.mxu0 0.0
    %110 = vmatpush2.msra.mxu0 0.0
    %111 = vmatprep.subr.mxu0 0.0
    %112 = vmatpush2.msra.mxu0 0.0
    %113 = vmatprep.subr.mxu0 0.0
    %114 = vmatpush2.msra.mxu0 0.0
    %115 = vmatprep.subr.mxu0 0.0
    %116 = vmatpush2.msra.mxu0 0.0
    %117 = vmatprep.subr.mxu0 0.0
    %118 = vmatpush2.msra.mxu0 0.0
    %119 = vmatprep.subr.mxu0 0.0
    %120 = vmatpush2.msra.mxu0 0.0
    %121 = vmatprep.subr.mxu0 0.0
    %122 = vmatpush2.msra.mxu0 0.0
    %123 = vmatprep.subr.mxu0 0.0
    %124 = vmatpush2.msra.mxu0 0.0
    %125 = vmatprep.subr.mxu0 0.0
    %126 = vmatpush2.msra.mxu0 0.0
    %127 = vmatprep.subr.mxu0 0.0
    %128 = vmatpush2.msra.mxu0 0.0
    %129 = vmatprep.subr.mxu0 0.0
    %130 = vmatpush2.msra.mxu0 0.0
    %131 = vmatprep.subr.mxu0 0.0
    %132 = vmatpush2.msra.mxu0 0.0
    %133 = vmatprep.subr.mxu0 0.0
    %134 = vmatpush2.msra.mxu0 0.0
    %135 = vmatprep.mubr.f32.mxu0 0.0
    %136 = vmatmul.mubr.f32.gmra.mxu0 %v69
    %v137 = vpop.f32.mrf.mxu0
    %v138 = vadd.f32 %v66, %v137
    %v139 = vpop.f32.mrf.mxu0
    %140 = vdwg.mxu0
    %v141 = vtanh.pop %v138
    %v142 = vadd.f32 %v141, 1.0
    %v143 = vmul.f32 %v142, 0.5
    %v145 = vlaneseq
    %v146 = vshrl.u32 %v145, 7
    %v147 = vsub.s32 0, %v146
    %v148 = vrot.slane %v63, %v147
    %149 = vrot.lane.b32.xlu0 %v148, 32
    %v150 = vpop.permute.xlu0 %149
    %v152 = vmul.f32 %v143, %v150
    %154 = vrot.lane.b32.xlu0 %v141, 32
    %v155 = vpop.permute.xlu0 %154
    %v157 = vmul.f32 %v143, %v155
    %159 = vrot.lane.b32.xlu0 %v157, 32
    %v160 = vpop.permute.xlu0 %159
    %v162 = vadd.f32 %v152, %v160
    %v163 = vtanh.pop %v162
    %165 = vrot.lane.b32.xlu0 %v163, 32
    %v166 = vpop.permute.xlu0 %165
    %v168 = vmul.f32 %v143, %v166
    %s169 = sld [smem:[#allocation2 + $0x1]]
    %s170 = scalar_lea.vmem %s1, %s169
    %v171 = vld [vmem:[%s170] sm:$0x1]
    %173 = vrot.lane.b32.xlu0 %v168, 64
    %v174 = vpop.permute.xlu0 %173
    %v175 = vsel %vm67, %v174, 0
    %177 = vmatprep.subr.mxu0 0.0
    %178 = vmatpush1.msra.mxu0 0.0
    %179 = vmatprep.subr.mxu0 0.0
    %180 = vmatpush1.msra.mxu0 0.0
    %181 = vmatprep.subr.mxu0 0.0
    %182 = vmatpush1.msra.mxu0 0.0
    %183 = vmatprep.subr.mxu0 0.0
    %184 = vmatpush1.msra.mxu0 0.0
    %185 = vmatprep.subr.mxu0 0.0
    %186 = vmatpush1.msra.mxu0 0.0
    %187 = vmatprep.subr.mxu0 0.0
    %188 = vmatpush1.msra.mxu0 0.0
    %189 = vmatprep.subr.mxu0 0.0
    %190 = vmatpush1.msra.mxu0 0.0
    %191 = vmatprep.subr.mxu0 0.0
    %192 = vmatpush1.msra.mxu0 0.0
    %193 = vmatprep.subr.mxu0 0.0
    %194 = vmatpush1.msra.mxu0 0.0
    %195 = vmatprep.subr.mxu0 0.0
    %196 = vmatpush1.msra.mxu0 0.0
    %197 = vmatprep.subr.mxu0 0.0
    %198 = vmatpush1.msra.mxu0 0.0
    %199 = vmatprep.subr.mxu0 0.0
    %200 = vmatpush1.msra.mxu0 0.0
    %201 = vmatprep.subr.mxu0 0.0
    %202 = vmatpush1.msra.mxu0 %v61
    %203 = vmatprep.subr.mxu0 0.0
    %204 = vmatpush1.msra.mxu0 %v60
    %205 = vmatprep.subr.mxu0 0.0
    %206 = vmatpush1.msra.mxu0 %v59
    %207 = vmatprep.subr.mxu0 0.0
    %208 = vmatpush1.msra.mxu0 %v58
    %209 = vmatprep.subr.mxu0 0.0
    %210 = vmatpush2.msra.mxu0 0.0
    %211 = vmatprep.subr.mxu0 0.0
    %212 = vmatpush2.msra.mxu0 0.0
    %213 = vmatprep.subr.mxu0 0.0
    %214 = vmatpush2.msra.mxu0 0.0
    %215 = vmatprep.subr.mxu0 0.0
    %216 = vmatpush2.msra.mxu0 0.0
    %217 = vmatprep.subr.mxu0 0.0
    %218 = vmatpush2.msra.mxu0 0.0
    %219 = vmatprep.subr.mxu0 0.0
    %220 = vmatpush2.msra.mxu0 0.0
    %221 = vmatprep.subr.mxu0 0.0
    %222 = vmatpush2.msra.mxu0 0.0
    %223 = vmatprep.subr.mxu0 0.0
    %224 = vmatpush2.msra.mxu0 0.0
    %225 = vmatprep.subr.mxu0 0.0
    %226 = vmatpush2.msra.mxu0 0.0
    %227 = vmatprep.subr.mxu0 0.0
    %228 = vmatpush2.msra.mxu0 0.0
    %229 = vmatprep.subr.mxu0 0.0
    %230 = vmatpush2.msra.mxu0 0.0
    %231 = vmatprep.subr.mxu0 0.0
    %232 = vmatpush2.msra.mxu0 0.0
    %233 = vmatprep.subr.mxu0 0.0
    %234 = vmatpush2.msra.mxu0 0.0
    %235 = vmatprep.subr.mxu0 0.0
    %236 = vmatpush2.msra.mxu0 0.0
    %237 = vmatprep.subr.mxu0 0.0
    %238 = vmatpush2.msra.mxu0 0.0
    %239 = vmatprep.subr.mxu0 0.0
    %240 = vmatpush2.msra.mxu0 0.0
    %241 = vmatprep.mubr.f32.mxu0 0.0
    %242 = vmatmul.mubr.f32.gmra.mxu0 %v175
    %v243 = vpop.f32.mrf.mxu0
    %v244 = vadd.f32 %v171, %v243
    %v245 = vpop.f32.mrf.mxu0
    %246 = vdwg.mxu0
    %v247 = vtanh.pop %v244
    %v248 = vadd.f32 %v247, 1.0
    %v249 = vmul.f32 %v248, 0.5
    %v250 = vmul.f32 %v249, %v162
    %252 = vrot.lane.b32.xlu0 %v247, 32
    %v253 = vpop.permute.xlu0 %252
    %v255 = vmul.f32 %v249, %v253
    %257 = vrot.lane.b32.xlu0 %v255, 32
    %v258 = vpop.permute.xlu0 %257
    %v260 = vadd.f32 %v250, %v258
    %v261 = vtanh.pop %v260
    %263 = vrot.lane.b32.xlu0 %v261, 32
    %v264 = vpop.permute.xlu0 %263
    %v266 = vmul.f32 %v249, %v264
    %s267 = sld [smem:[#allocation2 + $0x2]]
    %s268 = scalar_lea.vmem %s1, %s267
    %v269 = vld [vmem:[%s268] sm:$0x1]
    %271 = vrot.lane.b32.xlu0 %v266, 64
    %v272 = vpop.permute.xlu0 %271
    %v273 = vsel %vm67, %v272, 0
    %275 = vmatprep.subr.mxu0 0.0
    %276 = vmatpush1.msra.mxu0 0.0
    %277 = vmatprep.subr.mxu0 0.0
    %278 = vmatpush1.msra.mxu0 0.0
    %279 = vmatprep.subr.mxu0 0.0
    %280 = vmatpush1.msra.mxu0 0.0
    %281 = vmatprep.subr.mxu0 0.0
    %282 = vmatpush1.msra.mxu0 0.0
    %283 = vmatprep.subr.mxu0 0.0
    %284 = vmatpush1.msra.mxu0 0.0
    %285 = vmatprep.subr.mxu0 0.0
    %286 = vmatpush1.msra.mxu0 0.0
    %287 = vmatprep.subr.mxu0 0.0
    %288 = vmatpush1.msra.mxu0 0.0
    %289 = vmatprep.subr.mxu0 0.0
    %290 = vmatpush1.msra.mxu0 0.0
    %291 = vmatprep.subr.mxu0 0.0
    %292 = vmatpush1.msra.mxu0 0.0
    %293 = vmatprep.subr.mxu0 0.0
    %294 = vmatpush1.msra.mxu0 0.0
    %295 = vmatprep.subr.mxu0 0.0
    %296 = vmatpush1.msra.mxu0 0.0
    %297 = vmatprep.subr.mxu0 0.0
    %298 = vmatpush1.msra.mxu0 0.0
    %299 = vmatprep.subr.mxu0 0.0
    %300 = vmatpush1.msra.mxu0 %v61
    %301 = vmatprep.subr.mxu0 0.0
    %302 = vmatpush1.msra.mxu0 %v60
    %303 = vmatprep.subr.mxu0 0.0
    %304 = vmatpush1.msra.mxu0 %v59
    %305 = vmatprep.subr.mxu0 0.0
    %306 = vmatpush1.msra.mxu0 %v58
    %307 = vmatprep.subr.mxu0 0.0
    %308 = vmatpush2.msra.mxu0 0.0
    %309 = vmatprep.subr.mxu0 0.0
    %310 = vmatpush2.msra.mxu0 0.0
    %311 = vmatprep.subr.mxu0 0.0
    %312 = vmatpush2.msra.mxu0 0.0
    %313 = vmatprep.subr.mxu0 0.0
    %314 = vmatpush2.msra.mxu0 0.0
    %315 = vmatprep.subr.mxu0 0.0
    %316 = vmatpush2.msra.mxu0 0.0
    %317 = vmatprep.subr.mxu0 0.0
    %318 = vmatpush2.msra.mxu0 0.0
    %319 = vmatprep.subr.mxu0 0.0
    %320 = vmatpush2.msra.mxu0 0.0
    %321 = vmatprep.subr.mxu0 0.0
    %322 = vmatpush2.msra.mxu0 0.0
    %323 = vmatprep.subr.mxu0 0.0
    %324 = vmatpush2.msra.mxu0 0.0
    %325 = vmatprep.subr.mxu0 0.0
    %326 = vmatpush2.msra.mxu0 0.0
    %327 = vmatprep.subr.mxu0 0.0
    %328 = vmatpush2.msra.mxu0 0.0
    %329 = vmatprep.subr.mxu0 0.0
    %330 = vmatpush2.msra.mxu0 0.0
    %331 = vmatprep.subr.mxu0 0.0
    %332 = vmatpush2.msra.mxu0 0.0
    %333 = vmatprep.subr.mxu0 0.0
    %334 = vmatpush2.msra.mxu0 0.0
    %335 = vmatprep.subr.mxu0 0.0
    %336 = vmatpush2.msra.mxu0 0.0
    %337 = vmatprep.subr.mxu0 0.0
    %338 = vmatpush2.msra.mxu0 0.0
    %339 = vmatprep.mubr.f32.mxu0 0.0
    %340 = vmatmul.mubr.f32.gmra.mxu0 %v273
    %v341 = vpop.f32.mrf.mxu0
    %v342 = vadd.f32 %v269, %v341
    %v343 = vpop.f32.mrf.mxu0
    %344 = vdwg.mxu0
    %v345 = vtanh.pop %v342
    %v346 = vadd.f32 %v345, 1.0
    %v347 = vmul.f32 %v346, 0.5
    %v348 = vmul.f32 %v347, %v260
    %350 = vrot.lane.b32.xlu0 %v345, 32
    %v351 = vpop.permute.xlu0 %350
    %v353 = vmul.f32 %v347, %v351
    %355 = vrot.lane.b32.xlu0 %v353, 32
    %v356 = vpop.permute.xlu0 %355
    %v358 = vadd.f32 %v348, %v356
    %v359 = vtanh.pop %v358
    %361 = vrot.lane.b32.xlu0 %v359, 32
    %v362 = vpop.permute.xlu0 %361
    %v364 = vmul.f32 %v347, %v362
    %s365 = sld [smem:[#allocation2 + $0x3]]
    %s366 = scalar_lea.vmem %s1, %s365
    %v367 = vld [vmem:[%s366] sm:$0x1]
    %369 = vrot.lane.b32.xlu0 %v364, 64
    %v370 = vpop.permute.xlu0 %369
    %v371 = vsel %vm67, %v370, 0
    %373 = vmatprep.subr.mxu0 0.0
    %374 = vmatpush1.msra.mxu0 0.0
    %375 = vmatprep.subr.mxu0 0.0
    %376 = vmatpush1.msra.mxu0 0.0
    %377 = vmatprep.subr.mxu0 0.0
    %378 = vmatpush1.msra.mxu0 0.0
    %379 = vmatprep.subr.mxu0 0.0
    %380 = vmatpush1.msra.mxu0 0.0
    %381 = vmatprep.subr.mxu0 0.0
    %382 = vmatpush1.msra.mxu0 0.0
    %383 = vmatprep.subr.mxu0 0.0
    %384 = vmatpush1.msra.mxu0 0.0
    %385 = vmatprep.subr.mxu0 0.0
    %386 = vmatpush1.msra.mxu0 0.0
    %387 = vmatprep.subr.mxu0 0.0
    %388 = vmatpush1.msra.mxu0 0.0
    %389 = vmatprep.subr.mxu0 0.0
    %390 = vmatpush1.msra.mxu0 0.0
    %391 = vmatprep.subr.mxu0 0.0
    %392 = vmatpush1.msra.mxu0 0.0
    %393 = vmatprep.subr.mxu0 0.0
    %394 = vmatpush1.msra.mxu0 0.0
    %395 = vmatprep.subr.mxu0 0.0
    %396 = vmatpush1.msra.mxu0 0.0
    %397 = vmatprep.subr.mxu0 0.0
    %398 = vmatpush1.msra.mxu0 %v61
    %399 = vmatprep.subr.mxu0 0.0
    %400 = vmatpush1.msra.mxu0 %v60
    %401 = vmatprep.subr.mxu0 0.0
    %402 = vmatpush1.msra.mxu0 %v59
    %403 = vmatprep.subr.mxu0 0.0
    %404 = vmatpush1.msra.mxu0 %v58
    %405 = vmatprep.subr.mxu0 0.0
    %406 = vmatpush2.msra.mxu0 0.0
    %407 = vmatprep.subr.mxu0 0.0
    %408 = vmatpush2.msra.mxu0 0.0
    %409 = vmatprep.subr.mxu0 0.0
    %410 = vmatpush2.msra.mxu0 0.0
    %411 = vmatprep.subr.mxu0 0.0
    %412 = vmatpush2.msra.mxu0 0.0
    %413 = vmatprep.subr.mxu0 0.0
    %414 = vmatpush2.msra.mxu0 0.0
    %415 = vmatprep.subr.mxu0 0.0
    %416 = vmatpush2.msra.mxu0 0.0
    %417 = vmatprep.subr.mxu0 0.0
    %418 = vmatpush2.msra.mxu0 0.0
    %419 = vmatprep.subr.mxu0 0.0
    %420 = vmatpush2.msra.mxu0 0.0
    %421 = vmatprep.subr.mxu0 0.0
    %422 = vmatpush2.msra.mxu0 0.0
    %423 = vmatprep.subr.mxu0 0.0
    %424 = vmatpush2.msra.mxu0 0.0
    %425 = vmatprep.subr.mxu0 0.0
    %426 = vmatpush2.msra.mxu0 0.0
    %427 = vmatprep.subr.mxu0 0.0
    %428 = vmatpush2.msra.mxu0 0.0
    %429 = vmatprep.subr.mxu0 0.0
    %430 = vmatpush2.msra.mxu0 0.0
    %431 = vmatprep.subr.mxu0 0.0
    %432 = vmatpush2.msra.mxu0 0.0
    %433 = vmatprep.subr.mxu0 0.0
    %434 = vmatpush2.msra.mxu0 0.0
    %435 = vmatprep.subr.mxu0 0.0
    %436 = vmatpush2.msra.mxu0 0.0
    %437 = vmatprep.mubr.f32.mxu0 0.0
    %438 = vmatmul.mubr.f32.gmra.mxu0 %v371
    %v439 = vpop.f32.mrf.mxu0
    %v440 = vadd.f32 %v367, %v439
    %v441 = vpop.f32.mrf.mxu0
    %442 = vdwg.mxu0
    %v443 = vtanh.pop %v440
    %v444 = vadd.f32 %v443, 1.0
    %v445 = vmul.f32 %v444, 0.5
    %v446 = vmul.f32 %v445, %v358
    %448 = vrot.lane.b32.xlu0 %v443, 32
    %v449 = vpop.permute.xlu0 %448
    %v451 = vmul.f32 %v445, %v449
    %453 = vrot.lane.b32.xlu0 %v451, 32
    %v454 = vpop.permute.xlu0 %453
    %v456 = vadd.f32 %v446, %v454
    %v457 = vtanh.pop %v456
    %459 = vrot.lane.b32.xlu0 %v457, 32
    %v460 = vpop.permute.xlu0 %459
    %v462 = vmul.f32 %v445, %v460
    %s463 = sld [smem:[#allocation2 + $0x4]]
    %s464 = scalar_lea.vmem %s1, %s463
    %v465 = vld [vmem:[%s464] sm:$0x1]
    %467 = vrot.lane.b32.xlu0 %v462, 64
    %v468 = vpop.permute.xlu0 %467
    %v469 = vsel %vm67, %v468, 0
    %471 = vmatprep.subr.mxu0 0.0
    %472 = vmatpush1.msra.mxu0 0.0
    %473 = vmatprep.subr.mxu0 0.0
    %474 = vmatpush1.msra.mxu0 0.0
    %475 = vmatprep.subr.mxu0 0.0
    %476 = vmatpush1.msra.mxu0 0.0
    %477 = vmatprep.subr.mxu0 0.0
    %478 = vmatpush1.msra.mxu0 0.0
    %479 = vmatprep.subr.mxu0 0.0
    %480 = vmatpush1.msra.mxu0 0.0
    %481 = vmatprep.subr.mxu0 0.0
    %482 = vmatpush1.msra.mxu0 0.0
    %483 = vmatprep.subr.mxu0 0.0
    %484 = vmatpush1.msra.mxu0 0.0
    %485 = vmatprep.subr.mxu0 0.0
    %486 = vmatpush1.msra.mxu0 0.0
    %487 = vmatprep.subr.mxu0 0.0
    %488 = vmatpush1.msra.mxu0 0.0
    %489 = vmatprep.subr.mxu0 0.0
    %490 = vmatpush1.msra.mxu0 0.0
    %491 = vmatprep.subr.mxu0 0.0
    %492 = vmatpush1.msra.mxu0 0.0
    %493 = vmatprep.subr.mxu0 0.0
    %494 = vmatpush1.msra.mxu0 0.0
    %495 = vmatprep.subr.mxu0 0.0
    %496 = vmatpush1.msra.mxu0 %v61
    %497 = vmatprep.subr.mxu0 0.0
    %498 = vmatpush1.msra.mxu0 %v60
    %499 = vmatprep.subr.mxu0 0.0
    %500 = vmatpush1.msra.mxu0 %v59
    %501 = vmatprep.subr.mxu0 0.0
    %502 = vmatpush1.msra.mxu0 %v58
    %503 = vmatprep.subr.mxu0 0.0
    %504 = vmatpush2.msra.mxu0 0.0
    %505 = vmatprep.subr.mxu0 0.0
    %506 = vmatpush2.msra.mxu0 0.0
    %507 = vmatprep.subr.mxu0 0.0
    %508 = vmatpush2.msra.mxu0 0.0
    %509 = vmatprep.subr.mxu0 0.0
    %510 = vmatpush2.msra.mxu0 0.0
    %511 = vmatprep.subr.mxu0 0.0
    %512 = vmatpush2.msra.mxu0 0.0
    %513 = vmatprep.subr.mxu0 0.0
    %514 = vmatpush2.msra.mxu0 0.0
    %515 = vmatprep.subr.mxu0 0.0
    %516 = vmatpush2.msra.mxu0 0.0
    %517 = vmatprep.subr.mxu0 0.0
    %518 = vmatpush2.msra.mxu0 0.0
    %519 = vmatprep.subr.mxu0 0.0
    %520 = vmatpush2.msra.mxu0 0.0
    %521 = vmatprep.subr.mxu0 0.0
    %522 = vmatpush2.msra.mxu0 0.0
    %523 = vmatprep.subr.mxu0 0.0
    %524 = vmatpush2.msra.mxu0 0.0
    %525 = vmatprep.subr.mxu0 0.0
    %526 = vmatpush2.msra.mxu0 0.0
    %527 = vmatprep.subr.mxu0 0.0
    %528 = vmatpush2.msra.mxu0 0.0
    %529 = vmatprep.subr.mxu0 0.0
    %530 = vmatpush2.msra.mxu0 0.0
    %531 = vmatprep.subr.mxu0 0.0
    %532 = vmatpush2.msra.mxu0 0.0
    %533 = vmatprep.subr.mxu0 0.0
    %534 = vmatpush2.msra.mxu0 0.0
    %535 = vmatprep.mubr.f32.mxu0 0.0
    %536 = vmatmul.mubr.f32.gmra.mxu0 %v469
    %v537 = vpop.f32.mrf.mxu0
    %v538 = vadd.f32 %v465, %v537
    %v539 = vpop.f32.mrf.mxu0
    %540 = vdwg.mxu0
    %v541 = vtanh.pop %v538
    %v542 = vadd.f32 %v541, 1.0
    %v543 = vmul.f32 %v542, 0.5
    %v544 = vmul.f32 %v543, %v456
    %546 = vrot.lane.b32.xlu0 %v541, 32
    %v547 = vpop.permute.xlu0 %546
    %v549 = vmul.f32 %v543, %v547
    %551 = vrot.lane.b32.xlu0 %v549, 32
    %v552 = vpop.permute.xlu0 %551
    %v554 = vadd.f32 %v544, %v552
    %v555 = vtanh.pop %v554
    %557 = vrot.lane.b32.xlu0 %v555, 32
    %v558 = vpop.permute.xlu0 %557
    %v560 = vmul.f32 %v543, %v558
    %s561 = sld [smem:[#allocation2 + $0x5]]
    %s562 = scalar_lea.vmem %s1, %s561
    %v563 = vld [vmem:[%s562] sm:$0x1]
    %565 = vrot.lane.b32.xlu0 %v560, 64
    %v566 = vpop.permute.xlu0 %565
    %v567 = vsel %vm67, %v566, 0
    %569 = vmatprep.subr.mxu0 0.0
    %570 = vmatpush1.msra.mxu0 0.0
    %571 = vmatprep.subr.mxu0 0.0
    %572 = vmatpush1.msra.mxu0 0.0
    %573 = vmatprep.subr.mxu0 0.0
    %574 = vmatpush1.msra.mxu0 0.0
    %575 = vmatprep.subr.mxu0 0.0
    %576 = vmatpush1.msra.mxu0 0.0
    %577 = vmatprep.subr.mxu0 0.0
    %578 = vmatpush1.msra.mxu0 0.0
    %579 = vmatprep.subr.mxu0 0.0
    %580 = vmatpush1.msra.mxu0 0.0
    %581 = vmatprep.subr.mxu0 0.0
    %582 = vmatpush1.msra.mxu0 0.0
    %583 = vmatprep.subr.mxu0 0.0
    %584 = vmatpush1.msra.mxu0 0.0
    %585 = vmatprep.subr.mxu0 0.0
    %586 = vmatpush1.msra.mxu0 0.0
    %587 = vmatprep.subr.mxu0 0.0
    %588 = vmatpush1.msra.mxu0 0.0
    %589 = vmatprep.subr.mxu0 0.0
    %590 = vmatpush1.msra.mxu0 0.0
    %591 = vmatprep.subr.mxu0 0.0
    %592 = vmatpush1.msra.mxu0 0.0
    %593 = vmatprep.subr.mxu0 0.0
    %594 = vmatpush1.msra.mxu0 %v61
    %595 = vmatprep.subr.mxu0 0.0
    %596 = vmatpush1.msra.mxu0 %v60
    %597 = vmatprep.subr.mxu0 0.0
    %598 = vmatpush1.msra.mxu0 %v59
    %599 = vmatprep.subr.mxu0 0.0
    %600 = vmatpush1.msra.mxu0 %v58
    %601 = vmatprep.subr.mxu0 0.0
    %602 = vmatpush2.msra.mxu0 0.0
    %603 = vmatprep.subr.mxu0 0.0
    %604 = vmatpush2.msra.mxu0 0.0
    %605 = vmatprep.subr.mxu0 0.0
    %606 = vmatpush2.msra.mxu0 0.0
    %607 = vmatprep.subr.mxu0 0.0
    %608 = vmatpush2.msra.mxu0 0.0
    %609 = vmatprep.subr.mxu0 0.0
    %610 = vmatpush2.msra.mxu0 0.0
    %611 = vmatprep.subr.mxu0 0.0
    %612 = vmatpush2.msra.mxu0 0.0
    %613 = vmatprep.subr.mxu0 0.0
    %614 = vmatpush2.msra.mxu0 0.0
    %615 = vmatprep.subr.mxu0 0.0
    %616 = vmatpush2.msra.mxu0 0.0
    %617 = vmatprep.subr.mxu0 0.0
    %618 = vmatpush2.msra.mxu0 0.0
    %619 = vmatprep.subr.mxu0 0.0
    %620 = vmatpush2.msra.mxu0 0.0
    %621 = vmatprep.subr.mxu0 0.0
    %622 = vmatpush2.msra.mxu0 0.0
    %623 = vmatprep.subr.mxu0 0.0
    %624 = vmatpush2.msra.mxu0 0.0
    %625 = vmatprep.subr.mxu0 0.0
    %626 = vmatpush2.msra.mxu0 0.0
    %627 = vmatprep.subr.mxu0 0.0
    %628 = vmatpush2.msra.mxu0 0.0
    %629 = vmatprep.subr.mxu0 0.0
    %630 = vmatpush2.msra.mxu0 0.0
    %631 = vmatprep.subr.mxu0 0.0
    %632 = vmatpush2.msra.mxu0 0.0
    %633 = vmatprep.mubr.f32.mxu0 0.0
    %634 = vmatmul.mubr.f32.gmra.mxu0 %v567
    %v635 = vpop.f32.mrf.mxu0
    %v636 = vadd.f32 %v563, %v635
    %v637 = vpop.f32.mrf.mxu0
    %638 = vdwg.mxu0
    %v639 = vtanh.pop %v636
    %v640 = vadd.f32 %v639, 1.0
    %v641 = vmul.f32 %v640, 0.5
    %v642 = vmul.f32 %v641, %v554
    %644 = vrot.lane.b32.xlu0 %v639, 32
    %v645 = vpop.permute.xlu0 %644
    %v647 = vmul.f32 %v641, %v645
    %649 = vrot.lane.b32.xlu0 %v647, 32
    %v650 = vpop.permute.xlu0 %649
    %v652 = vadd.f32 %v642, %v650
    %v653 = vtanh.pop %v652
    %655 = vrot.lane.b32.xlu0 %v653, 32
    %v656 = vpop.permute.xlu0 %655
    %v658 = vmul.f32 %v641, %v656
    %s659 = sld [smem:[#allocation2 + $0x6]]
    %s660 = scalar_lea.vmem %s1, %s659
    %v661 = vld [vmem:[%s660] sm:$0x1]
    %663 = vrot.lane.b32.xlu0 %v658, 64
    %v664 = vpop.permute.xlu0 %663
    %v665 = vsel %vm67, %v664, 0
    %667 = vmatprep.subr.mxu0 0.0
    %668 = vmatpush1.msra.mxu0 0.0
    %669 = vmatprep.subr.mxu0 0.0
    %670 = vmatpush1.msra.mxu0 0.0
    %671 = vmatprep.subr.mxu0 0.0
    %672 = vmatpush1.msra.mxu0 0.0
    %673 = vmatprep.subr.mxu0 0.0
    %674 = vmatpush1.msra.mxu0 0.0
    %675 = vmatprep.subr.mxu0 0.0
    %676 = vmatpush1.msra.mxu0 0.0
    %677 = vmatprep.subr.mxu0 0.0
    %678 = vmatpush1.msra.mxu0 0.0
    %679 = vmatprep.subr.mxu0 0.0
    %680 = vmatpush1.msra.mxu0 0.0
    %681 = vmatprep.subr.mxu0 0.0
    %682 = vmatpush1.msra.mxu0 0.0
    %683 = vmatprep.subr.mxu0 0.0
    %684 = vmatpush1.msra.mxu0 0.0
    %685 = vmatprep.subr.mxu0 0.0
    %686 = vmatpush1.msra.mxu0 0.0
    %687 = vmatprep.subr.mxu0 0.0
    %688 = vmatpush1.msra.mxu0 0.0
    %689 = vmatprep.subr.mxu0 0.0
    %690 = vmatpush1.msra.mxu0 0.0
    %691 = vmatprep.subr.mxu0 0.0
    %692 = vmatpush1.msra.mxu0 %v61
    %693 = vmatprep.subr.mxu0 0.0
    %694 = vmatpush1.msra.mxu0 %v60
    %695 = vmatprep.subr.mxu0 0.0
    %696 = vmatpush1.msra.mxu0 %v59
    %697 = vmatprep.subr.mxu0 0.0
    %698 = vmatpush1.msra.mxu0 %v58
    %699 = vmatprep.subr.mxu0 0.0
    %700 = vmatpush2.msra.mxu0 0.0
    %701 = vmatprep.subr.mxu0 0.0
    %702 = vmatpush2.msra.mxu0 0.0
    %703 = vmatprep.subr.mxu0 0.0
    %704 = vmatpush2.msra.mxu0 0.0
    %705 = vmatprep.subr.mxu0 0.0
    %706 = vmatpush2.msra.mxu0 0.0
    %707 = vmatprep.subr.mxu0 0.0
    %708 = vmatpush2.msra.mxu0 0.0
    %709 = vmatprep.subr.mxu0 0.0
    %710 = vmatpush2.msra.mxu0 0.0
    %711 = vmatprep.subr.mxu0 0.0
    %712 = vmatpush2.msra.mxu0 0.0
    %713 = vmatprep.subr.mxu0 0.0
    %714 = vmatpush2.msra.mxu0 0.0
    %715 = vmatprep.subr.mxu0 0.0
    %716 = vmatpush2.msra.mxu0 0.0
    %717 = vmatprep.subr.mxu0 0.0
    %718 = vmatpush2.msra.mxu0 0.0
    %719 = vmatprep.subr.mxu0 0.0
    %720 = vmatpush2.msra.mxu0 0.0
    %721 = vmatprep.subr.mxu0 0.0
    %722 = vmatpush2.msra.mxu0 0.0
    %723 = vmatprep.subr.mxu0 0.0
    %724 = vmatpush2.msra.mxu0 0.0
    %725 = vmatprep.subr.mxu0 0.0
    %726 = vmatpush2.msra.mxu0 0.0
    %727 = vmatprep.subr.mxu0 0.0
    %728 = vmatpush2.msra.mxu0 0.0
    %729 = vmatprep.subr.mxu0 0.0
    %730 = vmatpush2.msra.mxu0 0.0
    %731 = vmatprep.mubr.f32.mxu0 0.0
    %732 = vmatmul.mubr.f32.gmra.mxu0 %v665
    %v733 = vpop.f32.mrf.mxu0
    %v734 = vadd.f32 %v661, %v733
    %v735 = vpop.f32.mrf.mxu0
    %736 = vdwg.mxu0
    %v737 = vtanh.pop %v734
    %v738 = vadd.f32 %v737, 1.0
    %v739 = vmul.f32 %v738, 0.5
    %v740 = vmul.f32 %v739, %v652
    %742 = vrot.lane.b32.xlu0 %v737, 32
    %v743 = vpop.permute.xlu0 %742
    %v745 = vmul.f32 %v739, %v743
    %747 = vrot.lane.b32.xlu0 %v745, 32
    %v748 = vpop.permute.xlu0 %747
    %v750 = vadd.f32 %v740, %v748
    %v751 = vtanh.pop %v750
    %753 = vrot.lane.b32.xlu0 %v751, 32
    %v754 = vpop.permute.xlu0 %753
    %v756 = vmul.f32 %v739, %v754
    %s757 = sld [smem:[#allocation2 + $0x7]]
    %s758 = scalar_lea.vmem %s1, %s757
    %v759 = vld [vmem:[%s758] sm:$0x1]
    %761 = vrot.lane.b32.xlu0 %v756, 64
    %v762 = vpop.permute.xlu0 %761
    %v763 = vsel %vm67, %v762, 0
    %765 = vmatprep.subr.mxu0 0.0
    %766 = vmatpush1.msra.mxu0 0.0
    %767 = vmatprep.subr.mxu0 0.0
    %768 = vmatpush1.msra.mxu0 0.0
    %769 = vmatprep.subr.mxu0 0.0
    %770 = vmatpush1.msra.mxu0 0.0
    %771 = vmatprep.subr.mxu0 0.0
    %772 = vmatpush1.msra.mxu0 0.0
    %773 = vmatprep.subr.mxu0 0.0
    %774 = vmatpush1.msra.mxu0 0.0
    %775 = vmatprep.subr.mxu0 0.0
    %776 = vmatpush1.msra.mxu0 0.0
    %777 = vmatprep.subr.mxu0 0.0
    %778 = vmatpush1.msra.mxu0 0.0
    %779 = vmatprep.subr.mxu0 0.0
    %780 = vmatpush1.msra.mxu0 0.0
    %781 = vmatprep.subr.mxu0 0.0
    %782 = vmatpush1.msra.mxu0 0.0
    %783 = vmatprep.subr.mxu0 0.0
    %784 = vmatpush1.msra.mxu0 0.0
    %785 = vmatprep.subr.mxu0 0.0
    %786 = vmatpush1.msra.mxu0 0.0
    %787 = vmatprep.subr.mxu0 0.0
    %788 = vmatpush1.msra.mxu0 0.0
    %789 = vmatprep.subr.mxu0 0.0
    %790 = vmatpush1.msra.mxu0 %v61
    %791 = vmatprep.subr.mxu0 0.0
    %792 = vmatpush1.msra.mxu0 %v60
    %793 = vmatprep.subr.mxu0 0.0
    %794 = vmatpush1.msra.mxu0 %v59
    %795 = vmatprep.subr.mxu0 0.0
    %796 = vmatpush1.msra.mxu0 %v58
    %797 = vmatprep.subr.mxu0 0.0
    %798 = vmatpush2.msra.mxu0 0.0
    %799 = vmatprep.subr.mxu0 0.0
    %800 = vmatpush2.msra.mxu0 0.0
    %801 = vmatprep.subr.mxu0 0.0
    %802 = vmatpush2.msra.mxu0 0.0
    %803 = vmatprep.subr.mxu0 0.0
    %804 = vmatpush2.msra.mxu0 0.0
    %805 = vmatprep.subr.mxu0 0.0
    %806 = vmatpush2.msra.mxu0 0.0
    %807 = vmatprep.subr.mxu0 0.0
    %808 = vmatpush2.msra.mxu0 0.0
    %809 = vmatprep.subr.mxu0 0.0
    %810 = vmatpush2.msra.mxu0 0.0
    %811 = vmatprep.subr.mxu0 0.0
    %812 = vmatpush2.msra.mxu0 0.0
    %813 = vmatprep.subr.mxu0 0.0
    %814 = vmatpush2.msra.mxu0 0.0
    %815 = vmatprep.subr.mxu0 0.0
    %816 = vmatpush2.msra.mxu0 0.0
    %817 = vmatprep.subr.mxu0 0.0
    %818 = vmatpush2.msra.mxu0 0.0
    %819 = vmatprep.subr.mxu0 0.0
    %820 = vmatpush2.msra.mxu0 0.0
    %821 = vmatprep.subr.mxu0 0.0
    %822 = vmatpush2.msra.mxu0 0.0
    %823 = vmatprep.subr.mxu0 0.0
    %824 = vmatpush2.msra.mxu0 0.0
    %825 = vmatprep.subr.mxu0 0.0
    %826 = vmatpush2.msra.mxu0 0.0
    %827 = vmatprep.subr.mxu0 0.0
    %828 = vmatpush2.msra.mxu0 0.0
    %829 = vmatprep.mubr.f32.mxu0 0.0
    %830 = vmatmul.mubr.f32.gmra.mxu0 %v763
    %v831 = vpop.f32.mrf.mxu0
    %v832 = vadd.f32 %v759, %v831
    %v833 = vpop.f32.mrf.mxu0
    %834 = vdwg.mxu0
    %v835 = vtanh.pop %v832
    %v836 = vadd.f32 %v835, 1.0
    %v837 = vmul.f32 %v836, 0.5
    %v838 = vmul.f32 %v837, %v750
    %840 = vrot.lane.b32.xlu0 %v835, 32
    %v841 = vpop.permute.xlu0 %840
    %v843 = vmul.f32 %v837, %v841
    %845 = vrot.lane.b32.xlu0 %v843, 32
    %v846 = vpop.permute.xlu0 %845
    %v848 = vadd.f32 %v838, %v846
    %v849 = vtanh.pop %v848
    %851 = vrot.lane.b32.xlu0 %v849, 32
    %v852 = vpop.permute.xlu0 %851
    %v854 = vmul.f32 %v837, %v852
    %v855 = vld [vmem:[%s5] sm:$0xff]
    %v856 = vld [vmem:[%s5 + $0x8] sm:$0xff]
    %v857 = vld [vmem:[%s5 + $0x10] sm:$0xff]
    %v858 = vld [vmem:[%s5 + $0x18] sm:$0xff]
    %v859 = vld [vmem:[%s6] sm:$0x1]
    %861 = vrot.lane.b32.xlu0 %v854, 64
    %v862 = vpop.permute.xlu0 %861
    %v863 = vsel %vm67, %v862, 0
    %865 = vmatprep.subr.mxu0 0.0
    %866 = vmatpush1.msra.mxu0 0.0
    %867 = vmatprep.subr.mxu0 0.0
    %868 = vmatpush1.msra.mxu0 0.0
    %869 = vmatprep.subr.mxu0 0.0
    %870 = vmatpush1.msra.mxu0 0.0
    %871 = vmatprep.subr.mxu0 0.0
    %872 = vmatpush1.msra.mxu0 0.0
    %873 = vmatprep.subr.mxu0 0.0
    %874 = vmatpush1.msra.mxu0 0.0
    %875 = vmatprep.subr.mxu0 0.0
    %876 = vmatpush1.msra.mxu0 0.0
    %877 = vmatprep.subr.mxu0 0.0
    %878 = vmatpush1.msra.mxu0 0.0
    %879 = vmatprep.subr.mxu0 0.0
    %880 = vmatpush1.msra.mxu0 0.0
    %881 = vmatprep.subr.mxu0 0.0
    %882 = vmatpush1.msra.mxu0 0.0
    %883 = vmatprep.subr.mxu0 0.0
    %884 = vmatpush1.msra.mxu0 0.0
    %885 = vmatprep.subr.mxu0 0.0
    %886 = vmatpush1.msra.mxu0 0.0
    %887 = vmatprep.subr.mxu0 0.0
    %888 = vmatpush1.msra.mxu0 0.0
    %889 = vmatprep.subr.mxu0 0.0
    %890 = vmatpush1.msra.mxu0 %v858
    %891 = vmatprep.subr.mxu0 0.0
    %892 = vmatpush1.msra.mxu0 %v857
    %893 = vmatprep.subr.mxu0 0.0
    %894 = vmatpush1.msra.mxu0 %v856
    %895 = vmatprep.subr.mxu0 0.0
    %896 = vmatpush1.msra.mxu0 %v855
    %897 = vmatprep.subr.mxu0 0.0
    %898 = vmatpush2.msra.mxu0 0.0
    %899 = vmatprep.subr.mxu0 0.0
    %900 = vmatpush2.msra.mxu0 0.0
    %901 = vmatprep.subr.mxu0 0.0
    %902 = vmatpush2.msra.mxu0 0.0
    %903 = vmatprep.subr.mxu0 0.0
    %904 = vmatpush2.msra.mxu0 0.0
    %905 = vmatprep.subr.mxu0 0.0
    %906 = vmatpush2.msra.mxu0 0.0
    %907 = vmatprep.subr.mxu0 0.0
    %908 = vmatpush2.msra.mxu0 0.0
    %909 = vmatprep.subr.mxu0 0.0
    %910 = vmatpush2.msra.mxu0 0.0
    %911 = vmatprep.subr.mxu0 0.0
    %912 = vmatpush2.msra.mxu0 0.0
    %913 = vmatprep.subr.mxu0 0.0
    %914 = vmatpush2.msra.mxu0 0.0
    %915 = vmatprep.subr.mxu0 0.0
    %916 = vmatpush2.msra.mxu0 0.0
    %917 = vmatprep.subr.mxu0 0.0
    %918 = vmatpush2.msra.mxu0 0.0
    %919 = vmatprep.subr.mxu0 0.0
    %920 = vmatpush2.msra.mxu0 0.0
    %921 = vmatprep.subr.mxu0 0.0
    %922 = vmatpush2.msra.mxu0 0.0
    %923 = vmatprep.subr.mxu0 0.0
    %924 = vmatpush2.msra.mxu0 0.0
    %925 = vmatprep.subr.mxu0 0.0
    %926 = vmatpush2.msra.mxu0 0.0
    %927 = vmatprep.subr.mxu0 0.0
    %928 = vmatpush2.msra.mxu0 0.0
    %929 = vmatprep.mubr.f32.mxu0 0.0
    %930 = vmatmul.mubr.f32.gmra.mxu0 %v863
    %v931 = vpop.f32.mrf.mxu0
    %v932 = vadd.f32 %v859, %v931
    %v933 = vpop.f32.mrf.mxu0
    %934 = vdwg.mxu0
    %vm935 = vcmask 73728
    %v936 = vsel %vm935, %v932, -inf
    %937 = vmax.xlane.f32.xlu0 %v936
    %v938 = vpop.xlane.xlu0 %937
    %v939 = vsub.f32 %v932, %v938
    %v940 = vmul.f32 %v939, 1.442695
    %v941 = vpow.pop %v940
    %v942 = vsel %vm935, %v941, 0.0
    %943 = vadd.xlane.f32.xlu0 %v942
    %v944 = vpop.xlane.xlu0 %943
    %v945 = vlog2.pop %v944
    %v946 = vmul.f32 %v945, 0.6931472
    %v947 = vadd.f32 %v946, %v938
    %v948 = vsub.f32 %v932, %v947
    %949 = vst.msk [vmem:[#allocation7] sm:$0x1] %vm935, %v948
    %vm951 = vcmask 253952
    %952 = vst.msk [vmem:[#allocation8] sm:$0x1] %vm951, %v862
    %954 = vrot.lane.b32.xlu0 %v848, 96
    %v955 = vpop.permute.xlu0 %954
    %957 = vst.msk [vmem:[#allocation10] sm:$0x1] %vm951, %v955
    // Predicated region
    $region38: #{lstm_forward.1} parent=1 // pred_check
      _
    $region39: #{lstm_forward.1} parent=1 // pred_check_branch
      %959 = sbr.rel (0) target = $region41
    $region40: #{lstm_forward.1} parent=1 // pred_region
      %s961 = ssub.s32 16, 16
      %962 = vsyncadd [#allocation4], %s961
      %s964 = sshll.u32 [#allocation7], 4
      %s965 = int_to_ptr.vmem [resolvable:$true] %s964
      %967 = dma.vmem_to_hbm [thread:$0]  %s965, 16, %s7, [#allocation4]
    $region41: #{lstm_forward.1} parent=1 // pred_fallthru
      _
    // Predicated region
    $region42: #{lstm_forward.1} parent=1 // pred_check
      _
    $region43: #{lstm_forward.1} parent=1 // pred_check_branch
      %969 = sbr.rel (0) target = $region45
    $region44: #{lstm_forward.1} parent=1 // pred_region
      %s971 = ssub.s32 16, 16
      %972 = vsyncadd [#allocation9], %s971
      %s974 = sshll.u32 [#allocation8], 4
      %s975 = int_to_ptr.vmem [resolvable:$true] %s974
      %977 = dma.vmem_to_hbm [thread:$0]  %s975, 16, %s8, [#allocation9]
    $region45: #{lstm_forward.1} parent=1 // pred_fallthru
      _
    // Predicated region
    $region46: #{lstm_forward.1} parent=1 // pred_check
      _
    $region47: #{lstm_forward.1} parent=1 // pred_check_branch
      %979 = sbr.rel (0) target = $region49
    $region48: #{lstm_forward.1} parent=1 // pred_region
      %s981 = ssub.s32 16, 16
      %982 = vsyncadd [#allocation9], %s981
      %s984 = sshll.u32 [#allocation10], 4
      %s985 = int_to_ptr.vmem [resolvable:$true] %s984
      %987 = dma.vmem_to_hbm [thread:$0]  %s985, 16, %s9, [#allocation9]
    $region49: #{lstm_forward.1} parent=1 // pred_fallthru
      _
    // Predicated region
    $region50: #{lstm_forward.1} parent=1 // pred_check
      _
    $region51: #{lstm_forward.1} parent=1 // pred_check_branch
      %989 = sbr.rel (0) target = $region53
    $region52: #{lstm_forward.1} parent=1 // pred_region
      %990 = dma.done [#allocation4], 16
    $region53: #{lstm_forward.1} parent=1 // pred_fallthru
      _
    // Predicated region
    $region54: #{lstm_forward.1} parent=1 // pred_check
      _
    $region55: #{lstm_forward.1} parent=1 // pred_check_branch
      %992 = sbr.rel (0) target = $region57
    $region56: #{lstm_forward.1} parent=1 // pred_region
      %993 = dma.done [#allocation9], 16
    $region57: #{lstm_forward.1} parent=1 // pred_fallthru
      _
    // Predicated region
    $region58: #{lstm_forward.1} parent=1 // pred_check
      _
    $region59: #{lstm_forward.1} parent=1 // pred_check_branch
      %995 = sbr.rel (0) target = $region61
    $region60: #{lstm_forward.1} parent=1 // pred_region
      %996 = dma.done [#allocation9], 16
    $region61: #{lstm_forward.1} parent=1 // pred_fallthru
      _
    %997 = vsyncpa [#allocation3], 1
    %998 = vsyncpa [#allocation4], 1
    %999 = vsyncpa [#allocation9], 1
    %1000 = vsyncpa [#allocation5], 1

</llo_original>
